<compile_context>
chip_gen: v7x
topology: tpu7x:2x2x1
jax: 0.10.0
libtpu: 0.0.40
codegen_flags: <defaults>
</compile_context>

<pallas_src>
import jax
import jax.numpy as jnp
from jax.experimental import pallas as pl
from jax.experimental.pallas import tpu as pltpu


# ---------------------------------------------------------------------------
# Kernel
# ---------------------------------------------------------------------------
def _modality_attention_kernel(w1_ref, w2_ref, c1_ref, c2_ref, y_ref):
    # Blocks: w*_ref (bb, tt, T); c*_ref (bb, 1, Dp); y_ref (bb, tt, Dp).
    w1 = w1_ref[...].astype(jnp.float32)
    w2 = w2_ref[...].astype(jnp.float32)
    c1 = c1_ref[...].astype(jnp.float32)          # (bb, 1, Dp) column-sums of f1
    c2 = c2_ref[...].astype(jnp.float32)          # (bb, 1, Dp) column-sums of f2

    # Row-max of each modality's weight rows (lane reduction / XLU): (bb, tt)
    m1 = jnp.max(w1, axis=-1)
    m2 = jnp.max(w2, axis=-1)

    # 2-way softmax over the modality axis == sigmoid of the logit difference (EUP).
    s1 = jax.nn.sigmoid(m1 - m2)[:, :, None]      # (bb, tt, 1)

    # y = s1*c1 + (1-s1)*c2 == c2 + s1*(c1 - c2): single broadcast FMA on the VPU.
    y = c2 + s1 * (c1 - c2)                       # (bb, tt, Dp)
    y_ref[...] = y.astype(y_ref.dtype)


# ---------------------------------------------------------------------------
# Block-sizing helpers (padded-byte accounting, generation-aware VMEM limit)
# ---------------------------------------------------------------------------
def _round_up(n, m):
    return -(-n // m) * m


def _sublane_multiple(dtype):
    # f32 -> 8, bf16 -> 16, int8/fp8 -> 32 (sub-32-bit dtypes pack along sublanes).
    return 8 * max(1, 4 // jnp.dtype(dtype).itemsize)


def _tile_bytes(rows, cols, dtype):
    # Padded VMEM footprint of a (rows, cols) last-two-dims tile.
    it = jnp.dtype(dtype).itemsize
    return (_round_up(max(rows, 1), _sublane_multiple(dtype))
            * _round_up(max(cols, 1), 128) * it)


def _pick_vmem_limit_bytes():
    # Generation-aware scoped-VMEM limit: ~96 MiB on 128 MiB parts (v5e/v6e),
    # ~40 MiB on 64 MiB parts (v7x), leaving headroom for compiler scratch.
    cap = 64 * 1024 * 1024  # conservative fallback (v7x-sized)
    try:
        cap = int(pltpu.get_tpu_info().vmem_capacity_bytes)
    except Exception:
        pass
    if cap >= 100 * 1024 * 1024:
        return 96 * 1024 * 1024
    return min(40 * 1024 * 1024, (cap * 5) // 8)


# ---------------------------------------------------------------------------
# Wrapper
# ---------------------------------------------------------------------------
def modality_attention(w1, f1, w2, f2):
    """Pallas TPU implementation of ModalityAttention.forward.

    w1, w2: (B, T, T); f1, f2: (B, T, D)  ->  y: (B, T, D)
    Inputs may be float32 or bfloat16; compute is float32; output dtype = f1.dtype.
    """
    B, T, _ = w1.shape
    D = f1.shape[-1]
    w_dtype = w1.dtype
    out_dtype = f1.dtype

    # ---- wrapper-side column sums of the features (exact; tiny vs. the w streams)
    c1 = jnp.sum(f1.astype(jnp.float32), axis=1)          # (B, D)
    c2 = jnp.sum(f2.astype(jnp.float32), axis=1)

    # Lane-dense output: pad D to a multiple of 128 (zero-padded c lanes -> zero y
    # lanes); slice back afterwards.  Avoids masked partial stores on the write stream.
    Dp = _round_up(D, 128)
    if Dp != D:
        pad = ((0, 0), (0, Dp - D))
        c1 = jnp.pad(c1, pad)
        c2 = jnp.pad(c2, pad)
    c1 = c1[:, None, :]                                    # (B, 1, Dp)
    c2 = c2[:, None, :]

    # ---- block sizing against the generation-aware VMEM limit (padded bytes)
    vmem_limit = _pick_vmem_limit_bytes()
    budget = vmem_limit - 4 * 1024 * 1024                  # headroom for compiler scratch
    half = max(budget // 2, 1)                             # blocks are double-buffered

    def block_bytes(bb, tt):
        return (2 * bb * _tile_bytes(tt, T, w_dtype)           # w1 + w2 row tiles
                + 2 * bb * _tile_bytes(1, Dp, jnp.float32)     # c1 + c2 (resident per batch)
                + bb * _tile_bytes(tt, Dp, out_dtype))         # y tile

    sub = _sublane_multiple(w_dtype)

    # Largest row tile tt (a multiple of the sublane tile, capped at T) that fits.
    if block_bytes(1, T) <= half:
        tt = T
    else:
        per_row = (2 * _round_up(T, 128) * jnp.dtype(w_dtype).itemsize
                   + _round_up(Dp, 128) * jnp.dtype(out_dtype).itemsize)
        tt = max(sub, (half // max(per_row, 1)) // sub * sub)
        tt = min(tt, T)
        while tt > sub and block_bytes(1, tt) > half:
            tt -= sub
        # If even the minimum tile exceeds the budget (astronomical T), the compiler
        # will surface the VMEM overrun explicitly.

    # Batch several B rows per step only when a whole (T, T) w block fits; cap so the
    # grid keeps >= 2 steps (feeds both TensorCores on v7x; ~free on v5e/v6e).
    bb = 1
    if tt == T and B > 1:
        bb_cap = max(1, -(-B // 2))
        bb = min(bb_cap, max(1, half // max(1, block_bytes(1, tt))))
        while bb > 1 and block_bytes(bb, tt) > half:
            bb -= 1

    nb = -(-B // bb)
    nr = -(-T // tt)
    grid = (nb, nr)

    cost = pl.CostEstimate(
        flops=int(2 * B * T * T + 2 * B * T * Dp + B * T),
        transcendentals=int(B * T),
        bytes_accessed=int(2 * B * T * T * jnp.dtype(w_dtype).itemsize
                           + 2 * B * Dp * 4
                           + B * T * Dp * jnp.dtype(out_dtype).itemsize),
    )

    y = pl.pallas_call(
        _modality_attention_kernel,
        out_shape=jax.ShapeDtypeStruct((B, T, Dp), out_dtype),
        grid_spec=pltpu.PrefetchScalarGridSpec(
            num_scalar_prefetch=0,
            grid=grid,
            in_specs=[
                pl.BlockSpec((bb, tt, T), lambda b, r: (b, r, 0)),   # w1 row tile
                pl.BlockSpec((bb, tt, T), lambda b, r: (b, r, 0)),   # w2 row tile
                pl.BlockSpec((bb, 1, Dp), lambda b, r: (b, 0, 0)),   # c1 (resident over r)
                pl.BlockSpec((bb, 1, Dp), lambda b, r: (b, 0, 0)),   # c2 (resident over r)
            ],
            out_specs=pl.BlockSpec((bb, tt, Dp), lambda b, r: (b, r, 0)),
        ),
        compiler_params=pltpu.CompilerParams(
            dimension_semantics=("parallel", "parallel"),
            vmem_limit_bytes=vmem_limit,
        ),
        cost_estimate=cost,
    )(w1, w2, c1, c2)

    if Dp != D:
        y = y[:, :, :D]
    return y


# ---------------------------------------------------------------------------
# Reference + self-test
# ---------------------------------------------------------------------------
def _reference(w1, f1, w2, f2):
    # Pure-JAX transcription of the PyTorch forward, for verification.
    weights = jnp.stack([w1, w2], axis=0)                  # (2, B, T, T)
    weights = jnp.max(weights, axis=-1)                    # (2, B, T)
    weights = jax.nn.softmax(weights, axis=0)              # softmax over modality dim
    T = w1.shape[-2]
    weights = jnp.repeat(weights[..., None], T, axis=-1)   # (2, B, T, T)
    res1 = jnp.matmul(weights[0], f1)
    res2 = jnp.matmul(weights[1], f2)
    return res1 + res2


if __name__ == "__main__":
    B, T, D = 2, 8, 32
    key = jax.random.PRNGKey(0)
    k1, k2, k3, k4 = jax.random.split(key, 4)
    w1 = jax.random.normal(k1, (B, T, T), dtype=jnp.float32)
    w2 = jax.random.normal(k2, (B, T, T), dtype=jnp.float32)
    f1 = jax.random.normal(k3, (B, T, D), dtype=jnp.float32)
    f2 = jax.random.normal(k4, (B, T, D), dtype=jnp.float32)

    y = modality_attention(w1, f1, w2, f2)
    y = jax.block_until_ready(y)

    y_ref = _reference(w1, f1, w2, f2)
    assert y.shape == (B, T, D)
    assert jnp.allclose(y, y_ref, atol=1e-5, rtol=1e-5), "mismatch vs reference"

    print("KERNEL_OK")
</pallas_src>

<mosaic_0001>
module attributes {stable_mosaic.version = 11 : i64} {
  func.func @_modality_attention_kernel(%arg0: i32, %arg1: i32, %arg2: memref<1x8x8xf32, #tpu.memory_space<vmem>>, %arg3: memref<1x8x8xf32, #tpu.memory_space<vmem>>, %arg4: memref<1x1x128xf32, #tpu.memory_space<vmem>>, %arg5: memref<1x1x128xf32, #tpu.memory_space<vmem>>, %arg6: memref<1x8x128xf32, #tpu.memory_space<vmem>>) attributes {dimension_semantics = [#tpu.dimension_semantics<parallel>, #tpu.dimension_semantics<parallel>], iteration_bounds = array<i64: 2, 1>, scalar_prefetch = 0 : i64, scratch_operands = 0 : i64, tpu.core_type = #tpu.core_type<tc>, window_params = [{transform_indices = @transform_0, window_bounds = array<i64: 1, 8, 8>}, {transform_indices = @transform_1, window_bounds = array<i64: 1, 8, 8>}, {transform_indices = @transform_2, window_bounds = array<i64: 1, 1, 128>}, {transform_indices = @transform_3, window_bounds = array<i64: 1, 1, 128>}, {transform_indices = @transform_4, window_bounds = array<i64: 1, 8, 128>}]} {
    %c0 = arith.constant 0 : index
    %c0_0 = arith.constant 0 : index
    %c0_1 = arith.constant 0 : index
    %0 = vector.load %arg2[%c0, %c0_0, %c0_1] : memref<1x8x8xf32, #tpu.memory_space<vmem>>, vector<1x8x8xf32>
    %c0_2 = arith.constant 0 : index
    %c0_3 = arith.constant 0 : index
    %c0_4 = arith.constant 0 : index
    %1 = vector.load %arg3[%c0_2, %c0_3, %c0_4] : memref<1x8x8xf32, #tpu.memory_space<vmem>>, vector<1x8x8xf32>
    %c0_5 = arith.constant 0 : index
    %c0_6 = arith.constant 0 : index
    %c0_7 = arith.constant 0 : index
    %2 = vector.load %arg4[%c0_5, %c0_6, %c0_7] : memref<1x1x128xf32, #tpu.memory_space<vmem>>, vector<1x1x128xf32>
    %c0_8 = arith.constant 0 : index
    %c0_9 = arith.constant 0 : index
    %c0_10 = arith.constant 0 : index
    %3 = vector.load %arg5[%c0_8, %c0_9, %c0_10] : memref<1x1x128xf32, #tpu.memory_space<vmem>>, vector<1x1x128xf32>
    %cst = arith.constant dense<0xFF800000> : vector<1x8xf32>
    %4 = vector.multi_reduction <maximumf>, %0, %cst [2] : vector<1x8x8xf32> to vector<1x8xf32>
    %cst_11 = arith.constant dense<0xFF800000> : vector<1x8xf32>
    %5 = vector.multi_reduction <maximumf>, %1, %cst_11 [2] : vector<1x8x8xf32> to vector<1x8xf32>
    %6 = arith.subf %4, %5 : vector<1x8xf32>
    %7 = arith.negf %6 : vector<1x8xf32>
    %8 = math.exp %7 : vector<1x8xf32>
    %cst_12 = arith.constant 1.000000e+00 : f32
    %9 = vector.broadcast %cst_12 : f32 to vector<1x8xf32>
    %10 = arith.addf %9, %8 : vector<1x8xf32>
    %11 = arith.divf %9, %10 : vector<1x8xf32>
    %12 = vector.shape_cast %11 : vector<1x8xf32> to vector<1x8x1xf32>
    %13 = arith.subf %2, %3 : vector<1x1x128xf32>
    %14 = vector.broadcast %12 : vector<1x8x1xf32> to vector<1x8x128xf32>
    %15 = vector.broadcast %13 : vector<1x1x128xf32> to vector<1x8x128xf32>
    %16 = arith.mulf %14, %15 : vector<1x8x128xf32>
    %17 = vector.broadcast %3 : vector<1x1x128xf32> to vector<1x8x128xf32>
    %18 = arith.addf %17, %16 : vector<1x8x128xf32>
    %c0_13 = arith.constant 0 : index
    %c0_14 = arith.constant 0 : index
    %c0_15 = arith.constant 0 : index
    %19 = vector.load %arg6[%c0_13, %c0_14, %c0_15] : memref<1x8x128xf32, #tpu.memory_space<vmem>>, vector<1x8x128xf32>
    tpu.vector_store %arg6[%c0_13, %c0_14, %c0_15], %18 {strides = array<i32>} : memref<1x8x128xf32, #tpu.memory_space<vmem>>, vector<1x8x128xf32>,
    return
  }
  func.func @transform_0(%arg0: i32, %arg1: i32) -> (i32, i32, i32) {
    %c0_i32 = arith.constant 0 : i32
    %c0_i32_0 = arith.constant 0 : i32
    return %arg0, %arg1, %c0_i32 : i32, i32, i32
  }
  func.func @transform_1(%arg0: i32, %arg1: i32) -> (i32, i32, i32) {
    %c0_i32 = arith.constant 0 : i32
    %c0_i32_0 = arith.constant 0 : i32
    return %arg0, %arg1, %c0_i32 : i32, i32, i32
  }
  func.func @transform_2(%arg0: i32, %arg1: i32) -> (i32, i32, i32) {
    %c0_i32 = arith.constant 0 : i32
    %c0_i32_0 = arith.constant 0 : i32
    %c0_i32_1 = arith.constant 0 : i32
    return %arg0, %c0_i32, %c0_i32_0 : i32, i32, i32
  }
  func.func @transform_3(%arg0: i32, %arg1: i32) -> (i32, i32, i32) {
    %c0_i32 = arith.constant 0 : i32
    %c0_i32_0 = arith.constant 0 : i32
    %c0_i32_1 = arith.constant 0 : i32
    return %arg0, %c0_i32, %c0_i32_0 : i32, i32, i32
  }
  func.func @transform_4(%arg0: i32, %arg1: i32) -> (i32, i32, i32) {
    %c0_i32 = arith.constant 0 : i32
    %c0_i32_0 = arith.constant 0 : i32
    return %arg0, %arg1, %c0_i32 : i32, i32, i32
  }
}

</mosaic_0001>

<llo_original>
// kernel: tpu_custom_call.1
$region0: #{tpu_custom_call.1}
  #allocation0 [shape = 'u32[]', space=smem, size = 0x4, offset = 0x4, fixed_abs, tag = 'smem constant byte address 0x4 - core index']
  #allocation1 [shape = 'u32[144,128]{1,0:T(1,128)}', space=vmem, size = 0x12000, scoped, tag = 'internal scratch']
  %s0 = inlined_call_operand.hbm [shape: f32[2,8,8], index: 0, kind: input, shape index: {}]
  %s1 = inlined_call_operand.hbm [shape: f32[2,8,8], index: 1, kind: input, shape index: {}]
  %s2 = inlined_call_operand.vmem [shape: f32[2,1,128], index: 2, kind: input, shape index: {}]
  %s3 = inlined_call_operand.vmem [shape: f32[2,1,128], index: 3, kind: input, shape index: {}]
  %s4 = inlined_call_operand.hbm [shape: f32[2,8,128], index: 4, kind: output, shape index: {}]
  %s5 = sld [smem:[#allocation0]]
  $region57: #{tpu_custom_call.1} parent=0
    _
  %s7 = ssub.s32 1, %s5
  %s8 = scalar_select 0, %s7, %s5
  $region1: #{tpu_custom_call.1} parent=0
    #allocation2 [shape = 'u8[8192]{0}', space=vmem, size = 0x2000, scoped, tag = 'input window, operand 0']
    #allocation3 [shape = 's32[2]{0}', space=sflag, size = 0x8, scoped, tag = 'scoped memory for tpu_custom_call.1']
    #allocation4 [shape = 's32[2]{0}', space=sflag, size = 0x8, scoped, tag = 'scoped memory for tpu_custom_call.1']
    #allocation5 [shape = 'u8[8192]{0}', space=vmem, size = 0x2000, scoped, tag = 'input window, operand 1']
    #allocation6 [shape = 's32[2]{0}', space=sflag, size = 0x8, scoped, tag = 'scoped memory for tpu_custom_call.1']
    #allocation7 [shape = 'u8[8192]{0}', space=vmem, size = 0x2000, scoped, tag = 'output window, operand 0']
    %9 = vsyncpa [#allocation3], 0
    %s10 = scalar_lea.sflag [#allocation3], 1
    %11 = vsyncpa %s10, 0
    %12 = vsyncpa [#allocation6], 0
    %s13 = scalar_lea.sflag [#allocation6], 1
    %14 = vsyncpa %s13, 0
    %15 = vsyncpa [#allocation4], 0
    %s16 = scalar_lea.sflag [#allocation4], 1
    %17 = vsyncpa %s16, 0
    loop: start=0, step=1, limit=4
    $region2: #{tpu_custom_call.1} parent=1 // loop_pre_header
      _
    $region3: #{tpu_custom_call.1} parent=1 // loop_header
      %s19 = sphi 0, %s23
      %p20 = scmp.ge.s32.totalorder %s19, 4
      %s26 = sphi 0, %s38
      %s27 = sphi 0, %s34
      %s28 = sphi 0, %s26
      %s29 = sphi 0, %s27
      %s30 = sphi 0, %s28
      %s31 = sphi 0, %s29
      %s43 = sphi 0, %s45
      %s46 = sphi 0, %s43
      %s47 = sphi 0, %s46
      %s63 = sphi 0, %s47
      %s71 = sphi 0, %s73
      %s74 = sphi 0, %s71
      %s75 = sphi 0, %s74
      %s91 = sphi 0, %s75
      %s97 = sphi 0, %s99
      %s100 = sphi 0, %s97
      %s101 = sphi 0, %s100
      %s117 = sphi 0, %s101
      %s123 = sphi 0, %s125
      %s126 = sphi 0, %s123
      %s127 = sphi 0, %s126
      %s143 = sphi 0, %s127
      %s151 = sphi 0, %s153
      %s154 = sphi 0, %s151
      %s155 = sphi 0, %s154
      %s171 = sphi 0, %s155
    $region4: #{tpu_custom_call.1} parent=1 // loop_header_branch
      %22 = sbr.rel (%p20) target = $region8
    $region5: #{tpu_custom_call.1} parent=1 // loop_body
      %s24 = ssub.s32 %s19, 1
      %s25 = ssub.s32 %s19, 2
      %s32 = sadd.s32 1, %s27
      %p33 = scmp.ge.s32.totalorder %s32, 1
      %s34 = scalar_select %p33, 0, %s32
      %s35 = sadd.s32 1, %s26
      %s36 = scalar_select %p33, %s35, %s26
      %p37 = scmp.ge.s32.totalorder %s36, 2
      %s38 = scalar_select %p37, 0, %s36
      %s39 = ssub.s32 %s26, %s38
      %s40 = ssub.s32 %s27, %s34
      %s41 = sor.u32 %s39, %s40
      %p42 = scmp.eq.s32.totalorder %s41, 0
      %s44 = sadd.s32 %s43, 1
      %s45 = scalar_select %p42, %s43, %s44
      %p48 = pneg %p42
      %p49 = scmp.eq.s32.totalorder %s19, 1
      %p50 = por %p48, %p49
      %p51 = scmp.ne.s32.totalorder %s43, %s46
      %p52 = scmp.eq.s32.totalorder %s19, 0
      %p53 = por %p51, %p52
      %p54 = scmp.ne.s32.totalorder %s43, %s46
      %p55 = scmp.eq.s32.totalorder %s24, 1
      %p56 = por %p54, %p55
      %p57 = scmp.ne.s32.totalorder %s46, %s47
      %p58 = scmp.eq.s32.totalorder %s24, 0
      %p59 = por %p57, %p58
      %p60 = scmp.ne.s32.totalorder %s46, %s47
      %p61 = scmp.eq.s32.totalorder %s25, 1
      %p62 = por %p60, %p61
      %p64 = scmp.ne.s32.totalorder %s47, %s63
      %p65 = scmp.eq.s32.totalorder %s25, 0
      %p66 = por %p64, %p65
      %s67 = ssub.s32 %s26, %s38
      %s68 = ssub.s32 %s27, %s34
      %s69 = sor.u32 %s67, %s68
      %p70 = scmp.eq.s32.totalorder %s69, 0
      %s72 = sadd.s32 %s71, 1
      %s73 = scalar_select %p70, %s71, %s72
      %p76 = pneg %p70
      %p77 = scmp.eq.s32.totalorder %s19, 1
      %p78 = por %p76, %p77
      %p79 = scmp.ne.s32.totalorder %s71, %s74
      %p80 = scmp.eq.s32.totalorder %s19, 0
      %p81 = por %p79, %p80
      %p82 = scmp.ne.s32.totalorder %s71, %s74
      %p83 = scmp.eq.s32.totalorder %s24, 1
      %p84 = por %p82, %p83
      %p85 = scmp.ne.s32.totalorder %s74, %s75
      %p86 = scmp.eq.s32.totalorder %s24, 0
      %p87 = por %p85, %p86
      %p88 = scmp.ne.s32.totalorder %s74, %s75
      %p89 = scmp.eq.s32.totalorder %s25, 1
      %p90 = por %p88, %p89
      %p92 = scmp.ne.s32.totalorder %s75, %s91
      %p93 = scmp.eq.s32.totalorder %s25, 0
      %p94 = por %p92, %p93
      %s95 = ssub.s32 %s26, %s38
      %p96 = scmp.eq.s32.totalorder %s95, 0
      %s98 = sadd.s32 %s97, 1
      %s99 = scalar_select %p96, %s97, %s98
      %p102 = pneg %p96
      %p103 = scmp.eq.s32.totalorder %s19, 1
      %p104 = por %p102, %p103
      %p105 = scmp.ne.s32.totalorder %s97, %s100
      %p106 = scmp.eq.s32.totalorder %s19, 0
      %p107 = por %p105, %p106
      %p108 = scmp.ne.s32.totalorder %s97, %s100
      %p109 = scmp.eq.s32.totalorder %s24, 1
      %p110 = por %p108, %p109
      %p111 = scmp.ne.s32.totalorder %s100, %s101
      %p112 = scmp.eq.s32.totalorder %s24, 0
      %p113 = por %p111, %p112
      %p114 = scmp.ne.s32.totalorder %s100, %s101
      %p115 = scmp.eq.s32.totalorder %s25, 1
      %p116 = por %p114, %p115
      %p118 = scmp.ne.s32.totalorder %s101, %s117
      %p119 = scmp.eq.s32.totalorder %s25, 0
      %p120 = por %p118, %p119
      %s121 = ssub.s32 %s26, %s38
      %p122 = scmp.eq.s32.totalorder %s121, 0
      %s124 = sadd.s32 %s123, 1
      %s125 = scalar_select %p122, %s123, %s124
      %p128 = pneg %p122
      %p129 = scmp.eq.s32.totalorder %s19, 1
      %p130 = por %p128, %p129
      %p131 = scmp.ne.s32.totalorder %s123, %s126
      %p132 = scmp.eq.s32.totalorder %s19, 0
      %p133 = por %p131, %p132
      %p134 = scmp.ne.s32.totalorder %s123, %s126
      %p135 = scmp.eq.s32.totalorder %s24, 1
      %p136 = por %p134, %p135
      %p137 = scmp.ne.s32.totalorder %s126, %s127
      %p138 = scmp.eq.s32.totalorder %s24, 0
      %p139 = por %p137, %p138
      %p140 = scmp.ne.s32.totalorder %s126, %s127
      %p141 = scmp.eq.s32.totalorder %s25, 1
      %p142 = por %p140, %p141
      %p144 = scmp.ne.s32.totalorder %s127, %s143
      %p145 = scmp.eq.s32.totalorder %s25, 0
      %p146 = por %p144, %p145
      %s147 = ssub.s32 %s26, %s38
      %s148 = ssub.s32 %s27, %s34
      %s149 = sor.u32 %s147, %s148
      %p150 = scmp.eq.s32.totalorder %s149, 0
      %s152 = sadd.s32 %s151, 1
      %s153 = scalar_select %p150, %s151, %s152
      %p156 = pneg %p150
      %p157 = scmp.eq.s32.totalorder %s19, 1
      %p158 = por %p156, %p157
      %p159 = scmp.ne.s32.totalorder %s151, %s154
      %p160 = scmp.eq.s32.totalorder %s19, 0
      %p161 = por %p159, %p160
      %p162 = scmp.ne.s32.totalorder %s151, %s154
      %p163 = scmp.eq.s32.totalorder %s24, 1
      %p164 = por %p162, %p163
      %p165 = scmp.ne.s32.totalorder %s154, %s155
      %p166 = scmp.eq.s32.totalorder %s24, 0
      %p167 = por %p165, %p166
      %p168 = scmp.ne.s32.totalorder %s154, %s155
      %p169 = scmp.eq.s32.totalorder %s25, 1
      %p170 = por %p168, %p169
      %p172 = scmp.ne.s32.totalorder %s155, %s171
      %p173 = scmp.eq.s32.totalorder %s25, 0
      %p174 = por %p172, %p173
      %p175 = scmp.le.s32.totalorder 1, %s19
      %p176 = scmp.lt.s32.totalorder %s19, 3
      %p177 = pnand %p175, %p176
      %p178 = pneg %p177
      // Predicated region
      $region9: #{tpu_custom_call.1} parent=5 // pred_check
        _
      $region10: #{tpu_custom_call.1} parent=5 // pred_check_branch
        %180 = sbr.rel (%p177) target = $region12
      $region11: #{tpu_custom_call.1} parent=5 // pred_region
        %s181 = ssub.s32 %s19, 1
      $region12: #{tpu_custom_call.1} parent=5 // pred_fallthru
        _
      %p182 = scmp.lt.s32.totalorder %s19, 2
      // Predicated region
      $region13: #{tpu_custom_call.1} parent=5 // pred_check
        %p183 = pneg %p182
      $region14: #{tpu_custom_call.1} parent=5 // pred_check_branch
        %185 = sbr.rel (%p183) target = $region16
      $region15: #{tpu_custom_call.1} parent=5 // pred_region
        // Predicated region
        $region17: #{tpu_custom_call.1} parent=15 // pred_check
          %p186 = pneg %p53
        $region18: #{tpu_custom_call.1} parent=15 // pred_check_branch
          %188 = sbr.rel (%p186) target = $region20
        $region19: #{tpu_custom_call.1} parent=15 // pred_region
          %s189 = sand.u32 %s43, 1
          %s190 = scalar_lea.sflag [#allocation3], %s189
          %s191 = sand.u32 %s43, 1
          %s192 = smul.addr %s191, 8
          %s193 = scalar_lea.vmem [#allocation2], %s192
          %s195 = ssub.s32 128, 128
          %196 = vsyncadd %s190, %s195
          %s197 = sadd.s32 %s27, %s26
          %s198 = smul.addr %s197, 128
          %s199 = scalar_lea.hbm %s0, %s198
          %s201 = sshll.u32 %s193, 4
          %s202 = int_to_ptr.vmem [resolvable:$true] %s201
          %204 = dma.hbm_to_vmem [thread:$0]  %s199, 128, %s202, %s190
        $region20: #{tpu_custom_call.1} parent=15 // pred_fallthru
          _
        // Predicated region
        $region21: #{tpu_custom_call.1} parent=15 // pred_check
          %p205 = pneg %p81
        $region22: #{tpu_custom_call.1} parent=15 // pred_check_branch
          %207 = sbr.rel (%p205) target = $region24
        $region23: #{tpu_custom_call.1} parent=15 // pred_region
          %s208 = sand.u32 %s71, 1
          %s209 = scalar_lea.sflag [#allocation6], %s208
          %s210 = sand.u32 %s71, 1
          %s211 = smul.addr %s210, 8
          %s212 = scalar_lea.vmem [#allocation5], %s211
          %s214 = ssub.s32 128, 128
          %215 = vsyncadd %s209, %s214
          %s216 = sadd.s32 %s27, %s26
          %s217 = smul.addr %s216, 128
          %s218 = scalar_lea.hbm %s1, %s217
          %s220 = sshll.u32 %s212, 4
          %s221 = int_to_ptr.vmem [resolvable:$true] %s220
          %223 = dma.hbm_to_vmem [thread:$0]  %s218, 128, %s221, %s209
        $region24: #{tpu_custom_call.1} parent=15 // pred_fallthru
          _
        // Predicated region
        $region25: #{tpu_custom_call.1} parent=15 // pred_check
          %p224 = pneg %p107
        $region26: #{tpu_custom_call.1} parent=15 // pred_check_branch
          %226 = sbr.rel (%p224) target = $region28
        $region27: #{tpu_custom_call.1} parent=15 // pred_region
          %p227 = scmp.lt.s32.totalorder %s26, 1
          %s228 = scalar_select %p227, %s26, 1
          %s229 = scalar_lea.vmem %s2, %s228
        $region28: #{tpu_custom_call.1} parent=15 // pred_fallthru
          _
        // Predicated region
        $region29: #{tpu_custom_call.1} parent=15 // pred_check
          %p230 = pneg %p133
        $region30: #{tpu_custom_call.1} parent=15 // pred_check_branch
          %232 = sbr.rel (%p230) target = $region32
        $region31: #{tpu_custom_call.1} parent=15 // pred_region
          %p233 = scmp.lt.s32.totalorder %s26, 1
          %s234 = scalar_select %p233, %s26, 1
          %s235 = scalar_lea.vmem %s3, %s234
        $region32: #{tpu_custom_call.1} parent=15 // pred_fallthru
          _
      $region16: #{tpu_custom_call.1} parent=5 // pred_fallthru
        _
      %p236 = scmp.le.s32.totalorder 1, %s19
      %p237 = scmp.lt.s32.totalorder %s19, 3
      %p238 = pnand %p236, %p237
      %p239 = pneg %p238
      // Predicated region
      $region33: #{tpu_custom_call.1} parent=5 // pred_check
        _
      $region34: #{tpu_custom_call.1} parent=5 // pred_check_branch
        %241 = sbr.rel (%p238) target = $region36
      $region35: #{tpu_custom_call.1} parent=5 // pred_region
        %s242 = ssub.s32 %s19, 1
        %s243 = sand.u32 %s46, 1
        %s244 = scalar_lea.sflag [#allocation3], %s243
        %s245 = sand.u32 %s46, 1
        %s246 = smul.addr %s245, 8
        %s247 = scalar_lea.vmem [#allocation2], %s246
        // Predicated region
        $region37: #{tpu_custom_call.1} parent=35 // pred_check
          %p248 = pneg %p59
        $region38: #{tpu_custom_call.1} parent=35 // pred_check_branch
          %250 = sbr.rel (%p248) target = $region40
        $region39: #{tpu_custom_call.1} parent=35 // pred_region
          %251 = dma.done %s244, 128
        $region40: #{tpu_custom_call.1} parent=35 // pred_fallthru
          _
        %s252 = sand.u32 %s74, 1
        %s253 = scalar_lea.sflag [#allocation6], %s252
        %s254 = sand.u32 %s74, 1
        %s255 = smul.addr %s254, 8
        %s256 = scalar_lea.vmem [#allocation5], %s255
        // Predicated region
        $region41: #{tpu_custom_call.1} parent=35 // pred_check
          %p257 = pneg %p87
        $region42: #{tpu_custom_call.1} parent=35 // pred_check_branch
          %259 = sbr.rel (%p257) target = $region44
        $region43: #{tpu_custom_call.1} parent=35 // pred_region
          %260 = dma.done %s253, 128
        $region44: #{tpu_custom_call.1} parent=35 // pred_fallthru
          _
        %s261 = sand.u32 %s46, 1
        %s262 = scalar_lea.sflag [#allocation3], %s261
        %s263 = sand.u32 %s46, 1
        %s264 = smul.addr %s263, 8
        %s265 = scalar_lea.vmem [#allocation2], %s264
        %p266 = pneg %p59
        %p267 = pneg %p56
        %s268 = sand.u32 %s74, 1
        %s269 = scalar_lea.sflag [#allocation6], %s268
        %s270 = sand.u32 %s74, 1
        %s271 = smul.addr %s270, 8
        %s272 = scalar_lea.vmem [#allocation5], %s271
        %p273 = pneg %p87
        %p274 = pneg %p84
        %p275 = scmp.lt.s32.totalorder %s28, 1
        %s276 = scalar_select %p275, %s28, 1
        %s277 = scalar_lea.vmem %s2, %s276
        %p278 = pneg %p113
        %p279 = pneg %p110
        %p280 = scmp.lt.s32.totalorder %s28, 1
        %s281 = scalar_select %p280, %s28, 1
        %s282 = scalar_lea.vmem %s3, %s281
        %p283 = pneg %p139
        %p284 = pneg %p136
        %p285 = pneg %p167
        %p286 = pneg %p164
        %s287 = sand.u32 %s154, 1
        %s288 = scalar_lea.sflag [#allocation4], %s287
        %s289 = sand.u32 %s154, 1
        %s290 = smul.addr %s289, 8
        %s291 = scalar_lea.vmem [#allocation7], %s290
        %p292 = scmp.lt.s32.totalorder %s28, 1
        %s293 = scalar_select %p292, %s28, 1
        %s294 = scalar_lea.vmem %s2, %s293
        %p295 = scmp.lt.s32.totalorder %s28, 1
        %s296 = scalar_select %p295, %s28, 1
        %s297 = scalar_lea.vmem %s3, %s296
        %v298 = vld [vmem:[%s247] sm:$0xff]
        %v299 = vld [vmem:[%s256] sm:$0xff]
        %v300 = vld [vmem:[%s294] sm:$0x1]
        %v301 = vld [vmem:[%s297] sm:$0x1]
        %vm302 = vcmask 64512
        %v303 = vsel %vm302, %v298, -inf
        %304 = vmax.xlane.f32.xlu0 %v303
        %v305 = vpop.xlane.xlu0 %304
        %v306 = vsel %vm302, %v299, -inf
        %307 = vmax.xlane.f32.xlu0 %v306
        %v308 = vpop.xlane.xlu0 %307
        %v309 = vsub.f32 %v305, %v308
        %v310 = vxor.u32 %v309, 2147483648
        %v311 = vmul.f32 %v310, 1.442695
        %v312 = vpow.pop %v311
        %v313 = vadd.f32 %v312, 1.0
        %v314 = vrcp.pop %v313
        %v315 = vmul.f32 1.0, %v314
        %v316 = vsub.f32 %v300, %v301
        %v318 = vlaneseq
        %v319 = vshrl.u32 %v318, 7
        %v320 = vsub.s32 0, %v319
        %v321 = vrot.slane %v316, %v320
        %v323 = vmul.f32 %v315, %v321
        %v325 = vlaneseq
        %v326 = vshrl.u32 %v325, 7
        %v327 = vsub.s32 0, %v326
        %v328 = vrot.slane %v301, %v327
        %v330 = vadd.f32 %v328, %v323
        %331 = vst [vmem:[%s291] sm:$0xff] %v330
        %s332 = sand.u32 %s154, 1
        %s333 = scalar_lea.sflag [#allocation4], %s332
        %s334 = sand.u32 %s154, 1
        %s335 = smul.addr %s334, 8
        %s336 = scalar_lea.vmem [#allocation7], %s335
        // Predicated region
        $region45: #{tpu_custom_call.1} parent=35 // pred_check
          %p337 = pneg %p164
        $region46: #{tpu_custom_call.1} parent=35 // pred_check_branch
          %339 = sbr.rel (%p337) target = $region48
        $region47: #{tpu_custom_call.1} parent=35 // pred_region
          %s341 = ssub.s32 128, 128
          %342 = vsyncadd %s333, %s341
          %s343 = sadd.s32 %s29, %s28
          %s344 = smul.addr %s343, 128
          %s345 = scalar_lea.hbm %s4, %s344
          %s347 = sshll.u32 %s336, 4
          %s348 = int_to_ptr.vmem [resolvable:$true] %s347
          %350 = dma.vmem_to_hbm [thread:$0]  %s348, 128, %s345, %s333
        $region48: #{tpu_custom_call.1} parent=35 // pred_fallthru
          _
      $region36: #{tpu_custom_call.1} parent=5 // pred_fallthru
        _
      %p351 = scmp.le.s32.totalorder 2, %s19
      // Predicated region
      $region49: #{tpu_custom_call.1} parent=5 // pred_check
        %p352 = pneg %p351
      $region50: #{tpu_custom_call.1} parent=5 // pred_check_branch
        %354 = sbr.rel (%p352) target = $region52
      $region51: #{tpu_custom_call.1} parent=5 // pred_region
        %s355 = ssub.s32 %s19, 2
        // Predicated region
        $region53: #{tpu_custom_call.1} parent=51 // pred_check
          %p356 = pneg %p170
        $region54: #{tpu_custom_call.1} parent=51 // pred_check_branch
          %358 = sbr.rel (%p356) target = $region56
        $region55: #{tpu_custom_call.1} parent=51 // pred_region
          %s359 = sand.u32 %s155, 1
          %s360 = scalar_lea.sflag [#allocation4], %s359
          %s361 = sand.u32 %s155, 1
          %s362 = smul.addr %s361, 8
          %s363 = scalar_lea.vmem [#allocation7], %s362
          %364 = dma.done %s360, 128
        $region56: #{tpu_custom_call.1} parent=51 // pred_fallthru
          _
      $region52: #{tpu_custom_call.1} parent=5 // pred_fallthru
        _
    $region6: #{tpu_custom_call.1} parent=1 // loop_footer
      %s23 = sadd.s32 1, %s19
    $region7: #{tpu_custom_call.1} parent=1 // loop_footer_branch
      %18 = sbr.rel target = $region3
    $region8: #{tpu_custom_call.1} parent=1 // loop_exit
      _
    %365 = vsyncpa [#allocation3], 1
    %s366 = scalar_lea.sflag [#allocation3], 1
    %367 = vsyncpa %s366, 1
    %368 = vsyncpa [#allocation6], 1
    %s369 = scalar_lea.sflag [#allocation6], 1
    %370 = vsyncpa %s369, 1
    %371 = vsyncpa [#allocation4], 1
    %s372 = scalar_lea.sflag [#allocation4], 1
    %373 = vsyncpa %s372, 1

</llo_original>
